<compile_context>
chip_gen: v7x
topology: tpu7x:2x2x1
jax: 0.10.0
libtpu: 0.0.40
codegen_flags: <defaults>
</compile_context>

<pallas_src>
import functools

import jax
import jax.numpy as jnp
from jax.experimental import pallas as pl
from jax.experimental.pallas import tpu as pltpu


def _conv_band(r_ref, w_ref, *, k, kc, w_out, tm):
    """Stride-1 VALID conv of one output-row band.

    The kw tap axis is already folded into the row slab's channel dim by the
    wrapper; each kh tap is a whole-row (= static lane) shift of the flattened
    slab.  K dots of depth K*C_in accumulate in f32 vregs; the MXU has ample
    slack at these depths and this avoids a packed-dtype sublane concatenate
    of the patch slab.
    """
    r = r_ref[0, 0]            # (K*C_in, L) , L = (band_rows + K - 1) * W_out
    w = w_ref[...]             # (C_out, K*K*C_in), row order (kh, kw, ci)
    acc = None
    for kh in range(k):
        piece = r[:, kh * w_out: kh * w_out + tm]              # (K*C_in, tm)
        wk = w[:, kh * kc:(kh + 1) * kc]                       # (C_out, K*C_in)
        d = jnp.dot(wk, piece, preferred_element_type=jnp.float32)
        acc = d if acc is None else acc + d
    return acc                                                  # (C_out, tm) f32


def _deconv_block_kernel(*refs, k, kc, w_out, tm, inv_count, eps,
                         apply_bn, apply_relu, has_bias, has_stats):
    it = iter(refs)
    r_ref = next(it)
    w_ref = next(it)
    b_ref = next(it) if has_bias else None
    s_ref = next(it) if has_stats else None
    o_ref = next(it)

    y = _conv_band(r_ref, w_ref, k=k, kc=kc, w_out=w_out, tm=tm)

    if has_bias:
        y = y + b_ref[...]                                     # (C_out, 1) bcast

    if apply_bn:
        # Full-extent InstanceNorm2d (affine=False, biased variance),
        # single-pass moments over the lane (spatial) axis.
        s1 = jnp.sum(y, axis=-1, keepdims=True)
        s2 = jnp.sum(y * y, axis=-1, keepdims=True)
        mean = s1 * inv_count
        var = jnp.maximum(s2 * inv_count - mean * mean, 0.0)
        y = (y - mean) * jax.lax.rsqrt(var + eps)
    elif has_stats:
        st = s_ref[0]                                          # (C_out, 2)
        y = (y - st[:, 0:1]) * st[:, 1:2]                      # (y - mean) * rstd

    if apply_relu:
        y = jnp.maximum(y, 0.0)

    o_ref[0] = y.astype(o_ref.dtype)


def _deconv_stats_kernel(r_ref, w_ref, o_ref, *, k, kc, w_out, tm,
                         inv_count, eps):
    """Pass A of the tiled bn path: accumulate per-channel sum / sumsq across
    the band ('arbitrary') grid axis into the resident stats output block and
    finalize to (mean, rstd) on the last band."""
    t = pl.program_id(1)
    y = _conv_band(r_ref, w_ref, k=k, kc=kc, w_out=w_out, tm=tm)
    s1 = jnp.sum(y, axis=-1, keepdims=True)
    s2 = jnp.sum(y * y, axis=-1, keepdims=True)
    part = jnp.concatenate([s1, s2], axis=-1)                  # (C_out, 2)

    @pl.when(t == 0)
    def _():
        o_ref[0] = part

    @pl.when(t != 0)
    def _():
        o_ref[0] = o_ref[0] + part

    @pl.when(t == pl.num_programs(1) - 1)
    def _():
        acc = o_ref[0]
        mean = acc[:, 0:1] * inv_count
        var = jnp.maximum(acc[:, 1:2] * inv_count - mean * mean, 0.0)
        o_ref[0] = jnp.concatenate([mean, jax.lax.rsqrt(var + eps)], axis=-1)


def _maybe_vmem_limit(*block_bytes):
    # BlockSpec double-buffers each operand; add headroom for the f32
    # accumulator / temps.  Only override the scoped default when the
    # estimate exceeds the most conservative default (v5e: 16 MiB).
    need = 3 * sum(int(b) for b in block_bytes) + (2 << 20)
    if need <= (16 << 20):
        return None
    return min(need, 64 << 20)


@functools.partial(
    jax.jit,
    static_argnames=("stride", "padding", "output_padding", "bn", "relu",
                     "eps", "compute_dtype", "out_dtype", "block_rows"))
def deconv2d(x_nchw, weight, bias=None, *, stride=1, padding=0,
             output_padding=0, bn=True, relu=True, eps=1e-5,
             compute_dtype=jnp.bfloat16, out_dtype=jnp.float32,
             block_rows=None):
    """Forward pass of Deconv2d (ConvTranspose2d [+bias] -> InstanceNorm -> ReLU).

    x_nchw : (N, C_in, H, W) float32
    weight : (C_in, C_out, K, K) float32 (PyTorch ConvTranspose2d layout)
    bias   : optional (C_out,) float32 (module uses bias only when bn=False)
    block_rows: optional output-row band size; enables VMEM tiling with an
                accumulate-then-finalize InstanceNorm (needed for big images
                on v7x / v5e).  None = single block per image (fast path).
    returns: (N, C_out, H_out, W_out) in out_dtype
    """
    assert stride in (1, 2)
    n, c_in, h, w = x_nchw.shape
    c_in_w, c_out, k, k2 = weight.shape
    assert c_in == c_in_w and k == k2

    h_out = (h - 1) * stride - 2 * padding + k + output_padding
    w_out = (w - 1) * stride - 2 * padding + k + output_padding
    m = h_out * w_out
    kc = k * c_in
    kkc = k * k * c_in

    # InstanceNorm2d(affine=False) exactly cancels a per-channel conv bias, so
    # drop it on the bn path (the module only has a conv bias when bn=False).
    if bn:
        bias = None
    has_bias = bias is not None

    # Cast to the matmul input dtype up front: all wrapper intermediates and
    # the kernel's dominant row-slab DMA are half width for bf16.
    x = x_nchw.astype(compute_dtype)

    # zero-dilate spatially by `stride` (still NCHW)
    if stride > 1:
        h_d = (h - 1) * stride + 1
        w_d = (w - 1) * stride + 1
        xd = jnp.zeros((n, c_in, h_d, w_d), x.dtype)
        x = xd.at[:, :, ::stride, ::stride].set(x)
        # TODO(synk): stride-2 phase decomposition would avoid these zeros but
        # requires interleaved (non-lane-dense) output writeback; see header.

    # pad so a stride-1 VALID conv with the flipped kernel reproduces
    # ConvTranspose2d semantics (output_padding on bottom/right only)
    p = k - 1 - padding
    assert p >= 0, "kernel_size must exceed padding for this deconv rewrite"
    x = jnp.pad(x, ((0, 0), (0, 0),
                    (p, p + output_padding), (p, p + output_padding)))
    hp, wp = h_out + k - 1, w_out + k - 1
    assert x.shape[2:] == (hp, wp)

    # Fold ONLY the kw tap axis in the wrapper: Kx HBM instead of K^2x.
    #   rows4[n, kw*C_in + ci, hh, wo] = x_pad[n, ci, hh, wo + kw]
    rows4 = jnp.concatenate([x[:, :, :, kw:kw + w_out] for kw in range(k)],
                            axis=1)                    # (N, K*C_in, Hp, W_out)

    # Output-row band tiling.  Constraints: th | H_out and th*W_out % 128 == 0
    # (dense lane-aligned output tiles); fall back to a single band otherwise.
    th = h_out
    if block_rows is not None and block_rows < h_out:
        cand = [d for d in range(1, block_rows + 1)
                if h_out % d == 0 and (d * w_out) % 128 == 0]
        if cand:
            th = max(cand)
    n_bands = h_out // th
    tm = th * w_out

    if n_bands == 1:
        rows = rows4.reshape(n, 1, kc, hp * w_out)
    else:
        # duplicate the (K-1)-row halo per band so each band's block is dense
        rows = jnp.stack(
            [rows4[:, :, t * th:t * th + th + k - 1, :] for t in range(n_bands)],
            axis=1).reshape(n, n_bands, kc, (th + k - 1) * w_out)
    l = rows.shape[-1]

    # flipped weight -> (C_out, K*K*C_in), row order (kh, kw, ci) to match the
    # in-kernel tap assembly.
    w_flip = jnp.flip(weight, axis=(2, 3))             # (C_in, C_out, K, K)
    w_mat = jnp.transpose(w_flip, (1, 2, 3, 0)).reshape(c_out, kkc)
    w_mat = w_mat.astype(compute_dtype)

    cbytes = jnp.dtype(compute_dtype).itemsize
    obytes = jnp.dtype(out_dtype).itemsize

    rows_spec = pl.BlockSpec((1, 1, kc, l), lambda nn, t: (nn, t, 0, 0))
    w_spec = pl.BlockSpec((c_out, kkc), lambda nn, t: (0, 0))
    out_spec = pl.BlockSpec((1, c_out, tm), lambda nn, t: (nn, 0, t))

    vmem_limit = _maybe_vmem_limit(kc * l * cbytes,            # rows block
                                   c_out * tm * obytes,        # out block
                                   c_out * tm * 4,             # f32 accumulator
                                   c_out * kkc * cbytes)       # weight

    flops = 2 * n * m * kkc * c_out

    # ---- pass A (only when bn path is band-tiled): per-image (mean, rstd) ----
    stats = None
    if bn and n_bands > 1:
        stats_kernel = functools.partial(
            _deconv_stats_kernel, k=k, kc=kc, w_out=w_out, tm=tm,
            inv_count=1.0 / m, eps=eps)
        stats = pl.pallas_call(
            stats_kernel,
            out_shape=jax.ShapeDtypeStruct((n, c_out, 2), jnp.float32),
            grid_spec=pltpu.PrefetchScalarGridSpec(
                num_scalar_prefetch=0,
                grid=(n, n_bands),
                in_specs=[rows_spec, w_spec],
                out_specs=pl.BlockSpec((1, c_out, 2), lambda nn, t: (nn, 0, 0)),
            ),
            compiler_params=pltpu.CompilerParams(
                dimension_semantics=("parallel", "arbitrary"),
                vmem_limit_bytes=vmem_limit),
            cost_estimate=pl.CostEstimate(
                flops=flops,
                transcendentals=n * c_out,
                bytes_accessed=rows.size * cbytes + w_mat.size * cbytes
                + n * c_out * 2 * 4),
        )(rows, w_mat)
    has_stats = stats is not None

    # ---- main pass: conv [+bias] [+norm] [+relu] -> flattened NCHW output ----
    main_kernel = functools.partial(
        _deconv_block_kernel, k=k, kc=kc, w_out=w_out, tm=tm,
        inv_count=1.0 / m, eps=eps,
        apply_bn=(bn and not has_stats), apply_relu=relu,
        has_bias=has_bias, has_stats=has_stats)

    in_specs = [rows_spec, w_spec]
    args = [rows, w_mat]
    if has_bias:
        in_specs.append(pl.BlockSpec((c_out, 1), lambda nn, t: (0, 0)))
        args.append(bias.reshape(c_out, 1).astype(jnp.float32))
    if has_stats:
        in_specs.append(pl.BlockSpec((1, c_out, 2), lambda nn, t: (nn, 0, 0)))
        args.append(stats)

    out_flat = pl.pallas_call(
        main_kernel,
        out_shape=jax.ShapeDtypeStruct((n, c_out, m), out_dtype),
        grid_spec=pltpu.PrefetchScalarGridSpec(
            num_scalar_prefetch=0,
            grid=(n, n_bands),
            in_specs=in_specs,
            out_specs=out_spec,
        ),
        compiler_params=pltpu.CompilerParams(
            dimension_semantics=("parallel", "parallel"),
            vmem_limit_bytes=vmem_limit),
        cost_estimate=pl.CostEstimate(
            flops=flops,
            transcendentals=n * c_out,
            bytes_accessed=rows.size * cbytes + w_mat.size * cbytes
            + n * c_out * m * obytes),
    )(*args)

    # flattened NCHW -> NCHW (pure reshape, no transpose)
    return out_flat.reshape(n, c_out, h_out, w_out)


def _reference(x_nchw, weight, bias, *, stride, padding, output_padding,
               bn, relu, eps=1e-5):
    """Pure-JAX reference (same math, no Pallas) for verification."""
    n, c_in, h, w = x_nchw.shape
    _, c_out, k, _ = weight.shape
    x = x_nchw.astype(jnp.float32)
    if stride > 1:
        h_d = (h - 1) * stride + 1
        w_d = (w - 1) * stride + 1
        xd = jnp.zeros((n, c_in, h_d, w_d), x.dtype)
        x = xd.at[:, :, ::stride, ::stride].set(x)
    p = k - 1 - padding
    x = jnp.pad(x, ((0, 0), (0, 0),
                    (p, p + output_padding), (p, p + output_padding)))
    wk = jnp.flip(weight, axis=(2, 3))                 # (C_in, C_out, K, K)
    h_out = (h - 1) * stride - 2 * padding + k + output_padding
    w_out = (w - 1) * stride - 2 * padding + k + output_padding
    out = jnp.zeros((n, c_out, h_out, w_out), jnp.float32)
    for kh in range(k):
        for kw in range(k):
            patch = x[:, :, kh:kh + h_out, kw:kw + w_out]
            out = out + jnp.einsum('nchw,cd->ndhw', patch, wk[:, :, kh, kw])
    y = out
    if bias is not None:
        y = y + bias.reshape(1, c_out, 1, 1)
    if bn:
        mean = jnp.mean(y, axis=(2, 3), keepdims=True)
        var = jnp.mean((y - mean) ** 2, axis=(2, 3), keepdims=True)
        y = (y - mean) * jax.lax.rsqrt(var + eps)
    if relu:
        y = jnp.maximum(y, 0.0)
    return y


if __name__ == "__main__":
    key = jax.random.PRNGKey(0)
    kx, kw1, kw2, kb = jax.random.split(key, 4)

    # Deconv2d(in_channels=4, out_channels=8, kernel_size=3)
    N, C_IN, C_OUT, H, W, K = 2, 4, 8, 16, 16, 3
    x = jax.random.normal(kx, (N, C_IN, H, W), dtype=jnp.float32)
    w1 = 0.1 * jax.random.normal(kw1, (C_IN, C_OUT, K, K), dtype=jnp.float32)
    w2 = 0.1 * jax.random.normal(kw2, (C_IN, C_OUT, K, K), dtype=jnp.float32)
    b3 = 0.05 * jax.random.normal(kb, (C_OUT,), dtype=jnp.float32)

    # bf16-rounded copies for comparing the bf16-default paths.
    xb = x.astype(jnp.bfloat16).astype(jnp.float32)
    w1b = w1.astype(jnp.bfloat16).astype(jnp.float32)
    w2b = w2.astype(jnp.bfloat16).astype(jnp.float32)

    # 1) default module config (stride=1, bn, relu), exact f32 matmul inputs.
    out1 = deconv2d(x, w1, stride=1, padding=0, output_padding=0,
                    bn=True, relu=True, compute_dtype=jnp.float32)
    jax.block_until_ready(out1)
    ref1 = _reference(x, w1, None, stride=1, padding=0, output_padding=0,
                      bn=True, relu=True)
    assert out1.shape == (N, C_OUT, H + K - 1, W + K - 1)
    assert jnp.allclose(out1, ref1, atol=1e-4, rtol=1e-4)

    # 2) typical upsampling config, default bf16 matmul inputs (f32 accumulate).
    out2 = deconv2d(x, w2, stride=2, padding=1, output_padding=1,
                    bn=True, relu=True)
    jax.block_until_ready(out2)
    ref2 = _reference(xb, w2b, None, stride=2, padding=1, output_padding=1,
                      bn=True, relu=True)
    assert out2.shape == (N, C_OUT, 2 * H, 2 * W)
    assert jnp.allclose(out2, ref2, atol=5e-3, rtol=5e-3)

    # 3) bn=False path: ConvTranspose2d bias, no InstanceNorm (bf16 inputs).
    out3 = deconv2d(x, w1, bias=b3, stride=2, padding=1, output_padding=1,
                    bn=False, relu=True)
    jax.block_until_ready(out3)
    ref3 = _reference(xb, w1b, b3, stride=2, padding=1, output_padding=1,
                      bn=False, relu=True)
    assert out3.shape == (N, C_OUT, 2 * H, 2 * W)
    assert jnp.allclose(out3, ref3, atol=5e-3, rtol=5e-3)

    # 4) band-tiled accumulate-then-finalize InstanceNorm path (f32 to check
    #    the tiling machinery tightly): 4 bands of 8 output rows per image.
    out4 = deconv2d(x, w2, stride=2, padding=1, output_padding=1,
                    bn=True, relu=True, compute_dtype=jnp.float32,
                    block_rows=8)
    jax.block_until_ready(out4)
    ref4 = _reference(x, w2, None, stride=2, padding=1, output_padding=1,
                      bn=True, relu=True)
    assert jnp.allclose(out4, ref4, atol=1e-4, rtol=1e-4)

    # 5) bf16 output writeback (halves output HBM when the consumer takes bf16).
    out5 = deconv2d(x, w2, stride=2, padding=1, output_padding=1,
                    bn=True, relu=True, out_dtype=jnp.bfloat16)
    jax.block_until_ready(out5)
    assert out5.dtype == jnp.bfloat16
    assert jnp.allclose(out5.astype(jnp.float32), ref2, atol=2e-2, rtol=2e-2)

    print("KERNEL_OK")
</pallas_src>

<mosaic_0001>
module attributes {stable_mosaic.version = 11 : i64} {
  func.func @_deconv_block_kernel(%arg0: i32, %arg1: i32, %arg2: memref<1x1x12x360xf32, #tpu.memory_space<vmem>>, %arg3: memref<8x36xf32, #tpu.memory_space<vmem>>, %arg4: memref<1x8x324xf32, #tpu.memory_space<vmem>>) attributes {dimension_semantics = [#tpu.dimension_semantics<parallel>, #tpu.dimension_semantics<parallel>], iteration_bounds = array<i64: 2, 1>, scalar_prefetch = 0 : i64, scratch_operands = 0 : i64, tpu.core_type = #tpu.core_type<tc>, window_params = [{transform_indices = @transform_0, window_bounds = array<i64: 1, 1, 12, 360>}, {pipeline_mode = #tpu.pipeline_mode<synchronous>, transform_indices = @transform_1, window_bounds = array<i64: 8, 36>}, {transform_indices = @transform_2, window_bounds = array<i64: 1, 8, 324>}]} {
    %c0 = arith.constant 0 : index
    %c0_0 = arith.constant 0 : index
    %c0_1 = arith.constant 0 : index
    %c0_2 = arith.constant 0 : index
    %0 = vector.load %arg2[%c0, %c0_0, %c0_1, %c0_2] : memref<1x1x12x360xf32, #tpu.memory_space<vmem>>, vector<1x1x12x360xf32>
    %1 = vector.shape_cast %0 : vector<1x1x12x360xf32> to vector<12x360xf32>
    %c0_3 = arith.constant 0 : index
    %c0_4 = arith.constant 0 : index
    %2 = vector.load %arg3[%c0_3, %c0_4] : memref<8x36xf32, #tpu.memory_space<vmem>>, vector<8x36xf32>
    %3 = vector.extract_strided_slice %1 {offsets = [0, 0], sizes = [12, 324], strides = [1, 1]} : vector<12x360xf32> to vector<12x324xf32>
    %4 = vector.extract_strided_slice %2 {offsets = [0, 0], sizes = [8, 12], strides = [1, 1]} : vector<8x36xf32> to vector<8x12xf32>
    %cst = arith.constant dense<0.000000e+00> : vector<8x324xf32>
    %5 = tpu.matmul %4, %3, %cst {dimension_numbers = #tpu.dot_dimension_numbers<[1], [0], [0], [1], [0, 0, 1, 1], [], []>} : vector<8x12xf32>, vector<12x324xf32>, vector<8x324xf32> -> vector<8x324xf32>
    %6 = vector.extract_strided_slice %1 {offsets = [0, 18], sizes = [12, 324], strides = [1, 1]} : vector<12x360xf32> to vector<12x324xf32>
    %7 = vector.extract_strided_slice %2 {offsets = [0, 12], sizes = [8, 12], strides = [1, 1]} : vector<8x36xf32> to vector<8x12xf32>
    %cst_5 = arith.constant dense<0.000000e+00> : vector<8x324xf32>
    %8 = tpu.matmul %7, %6, %cst_5 {dimension_numbers = #tpu.dot_dimension_numbers<[1], [0], [0], [1], [0, 0, 1, 1], [], []>} : vector<8x12xf32>, vector<12x324xf32>, vector<8x324xf32> -> vector<8x324xf32>
    %9 = arith.addf %5, %8 : vector<8x324xf32>
    %10 = vector.extract_strided_slice %1 {offsets = [0, 36], sizes = [12, 324], strides = [1, 1]} : vector<12x360xf32> to vector<12x324xf32>
    %11 = vector.extract_strided_slice %2 {offsets = [0, 24], sizes = [8, 12], strides = [1, 1]} : vector<8x36xf32> to vector<8x12xf32>
    %cst_6 = arith.constant dense<0.000000e+00> : vector<8x324xf32>
    %12 = tpu.matmul %11, %10, %cst_6 {dimension_numbers = #tpu.dot_dimension_numbers<[1], [0], [0], [1], [0, 0, 1, 1], [], []>} : vector<8x12xf32>, vector<12x324xf32>, vector<8x324xf32> -> vector<8x324xf32>
    %13 = arith.addf %9, %12 : vector<8x324xf32>
    %cst_7 = arith.constant dense<0.000000e+00> : vector<8xf32>
    %14 = vector.multi_reduction <add>, %13, %cst_7 [1] : vector<8x324xf32> to vector<8xf32>
    %15 = vector.shape_cast %14 : vector<8xf32> to vector<8x1xf32>
    %16 = arith.mulf %13, %13 : vector<8x324xf32>
    %cst_8 = arith.constant dense<0.000000e+00> : vector<8xf32>
    %17 = vector.multi_reduction <add>, %16, %cst_8 [1] : vector<8x324xf32> to vector<8xf32>
    %18 = vector.shape_cast %17 : vector<8xf32> to vector<8x1xf32>
    %cst_9 = arith.constant 0.00308641978 : f32
    %19 = vector.broadcast %cst_9 : f32 to vector<8x1xf32>
    %20 = arith.mulf %15, %19 : vector<8x1xf32>
    %cst_10 = arith.constant 0.00308641978 : f32
    %21 = vector.broadcast %cst_10 : f32 to vector<8x1xf32>
    %22 = arith.mulf %18, %21 : vector<8x1xf32>
    %23 = arith.mulf %20, %20 : vector<8x1xf32>
    %24 = arith.subf %22, %23 : vector<8x1xf32>
    %cst_11 = arith.constant 0.000000e+00 : f32
    %25 = vector.broadcast %cst_11 : f32 to vector<8x1xf32>
    %26 = arith.maximumf %24, %25 : vector<8x1xf32>
    %27 = vector.broadcast %20 : vector<8x1xf32> to vector<8x324xf32>
    %28 = arith.subf %13, %27 : vector<8x324xf32>
    %cst_12 = arith.constant 9.99999974E-6 : f32
    %29 = vector.broadcast %cst_12 : f32 to vector<8x1xf32>
    %30 = arith.addf %26, %29 : vector<8x1xf32>
    %31 = math.rsqrt %30 : vector<8x1xf32>
    %32 = vector.broadcast %31 : vector<8x1xf32> to vector<8x324xf32>
    %33 = arith.mulf %28, %32 : vector<8x324xf32>
    %cst_13 = arith.constant 0.000000e+00 : f32
    %34 = vector.broadcast %cst_13 : f32 to vector<8x324xf32>
    %35 = arith.maximumf %33, %34 : vector<8x324xf32>
    %c0_14 = arith.constant 0 : index
    %c0_15 = arith.constant 0 : index
    %c0_16 = arith.constant 0 : index
    %36 = vector.load %arg4[%c0_14, %c0_15, %c0_16] : memref<1x8x324xf32, #tpu.memory_space<vmem>>, vector<1x8x324xf32>
    %37 = vector.shape_cast %36 : vector<1x8x324xf32> to vector<8x324xf32>
    %38 = vector.shape_cast %35 : vector<8x324xf32> to vector<1x8x324xf32>
    tpu.vector_store %arg4[%c0_14, %c0_15, %c0_16], %38 {strides = array<i32>} : memref<1x8x324xf32, #tpu.memory_space<vmem>>, vector<1x8x324xf32>,
    return
  }
  func.func @transform_0(%arg0: i32, %arg1: i32) -> (i32, i32, i32, i32) {
    %c0_i32 = arith.constant 0 : i32
    %c0_i32_0 = arith.constant 0 : i32
    %c0_i32_1 = arith.constant 0 : i32
    return %arg0, %arg1, %c0_i32, %c0_i32_0 : i32, i32, i32, i32
  }
  func.func @transform_1(%arg0: i32, %arg1: i32) -> (i32, i32) {
    %c0_i32 = arith.constant 0 : i32
    %c0_i32_0 = arith.constant 0 : i32
    %c0_i32_1 = arith.constant 0 : i32
    return %c0_i32, %c0_i32_0 : i32, i32
  }
  func.func @transform_2(%arg0: i32, %arg1: i32) -> (i32, i32, i32) {
    %c0_i32 = arith.constant 0 : i32
    %c0_i32_0 = arith.constant 0 : i32
    return %arg0, %c0_i32, %arg1 : i32, i32, i32
  }
}

</mosaic_0001>

<llo_original>
// kernel: deconv2d.1
$region0: #{deconv2d.1}
  #allocation0 [shape = 'u32[]', space=smem, size = 0x4, offset = 0x4, fixed_abs, tag = 'smem constant byte address 0x4 - core index']
  #allocation1 [shape = 'u32[144,128]{1,0:T(1,128)}', space=vmem, size = 0x12000, scoped, tag = 'internal scratch']
  %s0 = inlined_call_operand.vmem [shape: f32[2,1,12,360], index: 0, kind: input, shape index: {}]
  %s1 = inlined_call_operand.vmem [shape: f32[8,36], index: 1, kind: input, shape index: {}]
  %s2 = inlined_call_operand.vmem [shape: f32[2,8,324], index: 2, kind: output, shape index: {}]
  %s3 = sld [smem:[#allocation0]]
  $region41: #{deconv2d.1} parent=0
    _
  %s5 = ssub.s32 1, %s3
  %s6 = scalar_select 0, %s5, %s3
  loop: start=0, step=1, limit=4
  $region2: #{deconv2d.1} parent=0 // loop_pre_header
    _
  $region3: #{deconv2d.1} parent=0 // loop_header
    %s8 = sphi 0, %s12
    %p9 = scmp.ge.s32.totalorder %s8, 4
    %s15 = sphi 0, %s27
    %s16 = sphi 0, %s23
    %s17 = sphi 0, %s15
    %s18 = sphi 0, %s16
    %s19 = sphi 0, %s17
    %s20 = sphi 0, %s18
    %s32 = sphi 0, %s34
    %s35 = sphi 0, %s32
    %s36 = sphi 0, %s35
    %s52 = sphi 0, %s36
    %s56 = sphi 0, %s56
    %s58 = sphi 0, %s56
    %s59 = sphi 0, %s58
    %s73 = sphi 0, %s59
    %s81 = sphi 0, %s83
    %s84 = sphi 0, %s81
    %s85 = sphi 0, %s84
    %s101 = sphi 0, %s85
  $region4: #{deconv2d.1} parent=0 // loop_header_branch
    %11 = sbr.rel (%p9) target = $region8
  $region5: #{deconv2d.1} parent=0 // loop_body
    %s13 = ssub.s32 %s8, 1
    %s14 = ssub.s32 %s8, 2
    %s21 = sadd.s32 1, %s16
    %p22 = scmp.ge.s32.totalorder %s21, 1
    %s23 = scalar_select %p22, 0, %s21
    %s24 = sadd.s32 1, %s15
    %s25 = scalar_select %p22, %s24, %s15
    %p26 = scmp.ge.s32.totalorder %s25, 2
    %s27 = scalar_select %p26, 0, %s25
    %s28 = ssub.s32 %s15, %s27
    %s29 = ssub.s32 %s16, %s23
    %s30 = sor.u32 %s28, %s29
    %p31 = scmp.eq.s32.totalorder %s30, 0
    %s33 = sadd.s32 %s32, 1
    %s34 = scalar_select %p31, %s32, %s33
    %p37 = pneg %p31
    %p38 = scmp.eq.s32.totalorder %s8, 1
    %p39 = por %p37, %p38
    %p40 = scmp.ne.s32.totalorder %s32, %s35
    %p41 = scmp.eq.s32.totalorder %s8, 0
    %p42 = por %p40, %p41
    %p43 = scmp.ne.s32.totalorder %s32, %s35
    %p44 = scmp.eq.s32.totalorder %s13, 1
    %p45 = por %p43, %p44
    %p46 = scmp.ne.s32.totalorder %s35, %s36
    %p47 = scmp.eq.s32.totalorder %s13, 0
    %p48 = por %p46, %p47
    %p49 = scmp.ne.s32.totalorder %s35, %s36
    %p50 = scmp.eq.s32.totalorder %s14, 1
    %p51 = por %p49, %p50
    %p53 = scmp.ne.s32.totalorder %s36, %s52
    %p54 = scmp.eq.s32.totalorder %s14, 0
    %p55 = por %p53, %p54
    %s57 = sadd.s32 %s56, 1
    %p60 = scmp.eq.s32.totalorder %s8, 1
    %p61 = scmp.ne.s32.totalorder %s56, %s58
    %p62 = scmp.eq.s32.totalorder %s8, 0
    %p63 = por %p61, %p62
    %p64 = scmp.ne.s32.totalorder %s56, %s58
    %p65 = scmp.eq.s32.totalorder %s13, 1
    %p66 = por %p64, %p65
    %p67 = scmp.ne.s32.totalorder %s58, %s59
    %p68 = scmp.eq.s32.totalorder %s13, 0
    %p69 = por %p67, %p68
    %p70 = scmp.ne.s32.totalorder %s58, %s59
    %p71 = scmp.eq.s32.totalorder %s14, 1
    %p72 = por %p70, %p71
    %p74 = scmp.ne.s32.totalorder %s59, %s73
    %p75 = scmp.eq.s32.totalorder %s14, 0
    %p76 = por %p74, %p75
    %s77 = ssub.s32 %s15, %s27
    %s78 = ssub.s32 %s16, %s23
    %s79 = sor.u32 %s77, %s78
    %p80 = scmp.eq.s32.totalorder %s79, 0
    %s82 = sadd.s32 %s81, 1
    %s83 = scalar_select %p80, %s81, %s82
    %p86 = pneg %p80
    %p87 = scmp.eq.s32.totalorder %s8, 1
    %p88 = por %p86, %p87
    %p89 = scmp.ne.s32.totalorder %s81, %s84
    %p90 = scmp.eq.s32.totalorder %s8, 0
    %p91 = por %p89, %p90
    %p92 = scmp.ne.s32.totalorder %s81, %s84
    %p93 = scmp.eq.s32.totalorder %s13, 1
    %p94 = por %p92, %p93
    %p95 = scmp.ne.s32.totalorder %s84, %s85
    %p96 = scmp.eq.s32.totalorder %s13, 0
    %p97 = por %p95, %p96
    %p98 = scmp.ne.s32.totalorder %s84, %s85
    %p99 = scmp.eq.s32.totalorder %s14, 1
    %p100 = por %p98, %p99
    %p102 = scmp.ne.s32.totalorder %s85, %s101
    %p103 = scmp.eq.s32.totalorder %s14, 0
    %p104 = por %p102, %p103
    %p105 = scmp.le.s32.totalorder 1, %s8
    %p106 = scmp.lt.s32.totalorder %s8, 3
    %p107 = pnand %p105, %p106
    %p108 = pneg %p107
    // Predicated region
    $region9: #{deconv2d.1} parent=5 // pred_check
      _
    $region10: #{deconv2d.1} parent=5 // pred_check_branch
      %110 = sbr.rel (%p107) target = $region12
    $region11: #{deconv2d.1} parent=5 // pred_region
      %s111 = ssub.s32 %s8, 1
      // Predicated region
      $region13: #{deconv2d.1} parent=11 // pred_check
        %p112 = pneg %p69
      $region14: #{deconv2d.1} parent=11 // pred_check_branch
        %114 = sbr.rel (%p112) target = $region16
      $region15: #{deconv2d.1} parent=11 // pred_region
        _
      $region16: #{deconv2d.1} parent=11 // pred_fallthru
        _
    $region12: #{deconv2d.1} parent=5 // pred_fallthru
      _
    %p115 = scmp.lt.s32.totalorder %s8, 2
    // Predicated region
    $region17: #{deconv2d.1} parent=5 // pred_check
      %p116 = pneg %p115
    $region18: #{deconv2d.1} parent=5 // pred_check_branch
      %118 = sbr.rel (%p116) target = $region20
    $region19: #{deconv2d.1} parent=5 // pred_region
      // Predicated region
      $region21: #{deconv2d.1} parent=19 // pred_check
        %p119 = pneg %p42
      $region22: #{deconv2d.1} parent=19 // pred_check_branch
        %121 = sbr.rel (%p119) target = $region24
      $region23: #{deconv2d.1} parent=19 // pred_region
        %p122 = scmp.lt.s32.totalorder %s15, 1
        %s123 = scalar_select %p122, %s15, 1
        %p124 = scmp.lt.s32.totalorder %s16, 0
        %s125 = scalar_select %p124, %s16, 0
        %s126 = smul.addr %s125, 6
        %s127 = smul.addr %s123, 6
        %s128 = sadd.s32 %s126, %s127
        %s129 = smul.addr %s128, 8
        %s130 = scalar_lea.vmem %s0, %s129
      $region24: #{deconv2d.1} parent=19 // pred_fallthru
        _
    $region20: #{deconv2d.1} parent=5 // pred_fallthru
      _
    %p131 = scmp.le.s32.totalorder 1, %s8
    %p132 = scmp.lt.s32.totalorder %s8, 3
    %p133 = pnand %p131, %p132
    %p134 = pneg %p133
    // Predicated region
    $region25: #{deconv2d.1} parent=5 // pred_check
      _
    $region26: #{deconv2d.1} parent=5 // pred_check_branch
      %136 = sbr.rel (%p133) target = $region28
    $region27: #{deconv2d.1} parent=5 // pred_region
      %s137 = ssub.s32 %s8, 1
      %p138 = scmp.lt.s32.totalorder %s17, 1
      %s139 = scalar_select %p138, %s17, 1
      %p140 = scmp.lt.s32.totalorder %s18, 0
      %s141 = scalar_select %p140, %s18, 0
      %s142 = smul.addr %s141, 6
      %s143 = smul.addr %s139, 6
      %s144 = sadd.s32 %s142, %s143
      %s145 = smul.addr %s144, 8
      %s146 = scalar_lea.vmem %s0, %s145
      %p147 = pneg %p48
      %p148 = pneg %p45
      %p149 = pneg %p69
      %p150 = pneg %p66
      %p151 = pneg %p97
      %p152 = pneg %p94
      %s153 = smul.u32 3, %s18
      %p154 = scmp.lt.s32.totalorder %s17, 1
      %s155 = scalar_select %p154, %s17, 1
      %p156 = scmp.lt.s32.totalorder %s153, 2
      %s157 = scalar_select %p156, %s153, 2
      %s158 = smul.addr %s155, 3
      %s159 = sadd.s32 %s157, %s158
      %s160 = smul.addr %s159, 8
      %s161 = scalar_lea.vmem %s2, %s160
      %p162 = scmp.lt.s32.totalorder %s17, 1
      %s163 = scalar_select %p162, %s17, 1
      %p164 = scmp.lt.s32.totalorder %s18, 0
      %s165 = scalar_select %p164, %s18, 0
      %s166 = smul.addr %s165, 6
      %s167 = smul.addr %s163, 6
      %s168 = sadd.s32 %s166, %s167
      %s169 = smul.addr %s168, 8
      %s170 = scalar_lea.vmem %s0, %s169
      %s171 = smul.u32 3, %s18
      %p172 = scmp.lt.s32.totalorder %s17, 1
      %s173 = scalar_select %p172, %s17, 1
      %p174 = scmp.lt.s32.totalorder %s171, 2
      %s175 = scalar_select %p174, %s171, 2
      %s176 = smul.addr %s173, 3
      %s177 = sadd.s32 %s175, %s176
      %s178 = smul.addr %s177, 8
      %s179 = scalar_lea.vmem %s2, %s178
      %s180 = smul.u32 3, %s18
      %v181 = vld [vmem:[%s170] sm:$0xff]
      %v182 = vld [vmem:[%s170 + $0x8] sm:$0xff]
      %v183 = vld [vmem:[%s170 + $0x10] sm:$0xff]
      %v184 = vld [vmem:[%s170 + $0x18] sm:$0xf]
      %v185 = vld [vmem:[%s170 + $0x20] sm:$0xf]
      %v186 = vld [vmem:[%s170 + $0x28] sm:$0xf]
      %v187 = vld [vmem:[%s1] sm:$0xff]
      %189 = vrot.lane.b32.xlu0 %v187, 116
      %v190 = vpop.permute.xlu0 %189
      %197 = vrot.lane.b32.xlu0 %v181, 110
      %v198 = vpop.permute.xlu0 %197
      %199 = vrot.lane.b32.xlu0 %v182, 110
      %v200 = vpop.permute.xlu0 %199
      %201 = vrot.lane.b32.xlu0 %v183, 110
      %v202 = vpop.permute.xlu0 %201
      %203 = vrot.lane.b32.xlu0 %v184, 110
      %v204 = vpop.permute.xlu0 %203
      %205 = vrot.lane.b32.xlu0 %v185, 110
      %v206 = vpop.permute.xlu0 %205
      %207 = vrot.lane.b32.xlu0 %v186, 110
      %v208 = vpop.permute.xlu0 %207
      %vm209 = vcmask 900096
      %v210 = vsel %vm209, %v198, %v200
      %v211 = vsel %vm209, %v200, %v202
      %v212 = vsel %vm209, %v204, %v206
      %v213 = vsel %vm209, %v206, %v208
      %vm217 = vcmask 97280
      %v218 = vsel %vm217, %v190, 0
      %vm220 = vcmask 1043456
      %v221 = vsel %vm220, %v212, 0
      %v223 = vsel %vm220, %v213, 0
      %v225 = vsel %vm220, %v208, 0
      %227 = vmatprep.subr.mxu0 %v211
      %228 = vmatpush1.msra.mxu0 %v210
      %229 = vmatprep.subr.mxu0 %v223
      %230 = vmatpush1.msra.mxu0 %v221
      %231 = vmatprep.subr.mxu0 0.0
      %232 = vmatpush1.msra.mxu0 0.0
      %233 = vmatprep.subr.mxu0 0.0
      %234 = vmatpush1.msra.mxu0 0.0
      %235 = vmatprep.subr.mxu0 0.0
      %236 = vmatpush1.msra.mxu0 0.0
      %237 = vmatprep.subr.mxu0 0.0
      %238 = vmatpush1.msra.mxu0 0.0
      %239 = vmatprep.subr.mxu0 0.0
      %240 = vmatpush1.msra.mxu0 0.0
      %241 = vmatprep.subr.mxu0 0.0
      %242 = vmatpush1.msra.mxu0 0.0
      %243 = vmatprep.subr.mxu0 0.0
      %244 = vmatpush1.msra.mxu0 0.0
      %245 = vmatprep.subr.mxu0 0.0
      %246 = vmatpush1.msra.mxu0 0.0
      %247 = vmatprep.subr.mxu0 0.0
      %248 = vmatpush1.msra.mxu0 0.0
      %249 = vmatprep.subr.mxu0 0.0
      %250 = vmatpush1.msra.mxu0 0.0
      %251 = vmatprep.subr.mxu0 0.0
      %252 = vmatpush1.msra.mxu0 0.0
      %253 = vmatprep.subr.mxu0 0.0
      %254 = vmatpush1.msra.mxu0 0.0
      %255 = vmatprep.subr.mxu0 0.0
      %256 = vmatpush1.msra.mxu0 0.0
      %257 = vmatprep.subr.mxu0 0.0
      %258 = vmatpush1.msra.mxu0 0.0
      %259 = vmatprep.subr.mxu0 0.0
      %260 = vmatpush1.msra.mxu0 0.0
      %261 = vmatprep.subr.mxu0 0.0
      %262 = vmatpush1.msra.mxu0 0.0
      %263 = vmatprep.subr.mxu0 0.0
      %264 = vmatpush1.msra.mxu0 0.0
      %265 = vmatprep.subr.mxu0 0.0
      %266 = vmatpush1.msra.mxu0 0.0
      %267 = vmatprep.subr.mxu0 0.0
      %268 = vmatpush1.msra.mxu0 0.0
      %269 = vmatprep.subr.mxu0 0.0
      %270 = vmatpush1.msra.mxu0 0.0
      %271 = vmatprep.subr.mxu0 0.0
      %272 = vmatpush1.msra.mxu0 0.0
      %273 = vmatprep.subr.mxu0 0.0
      %274 = vmatpush1.msra.mxu0 0.0
      %275 = vmatprep.subr.mxu0 0.0
      %276 = vmatpush1.msra.mxu0 0.0
      %277 = vmatprep.subr.mxu0 0.0
      %278 = vmatpush1.msra.mxu0 0.0
      %279 = vmatprep.subr.mxu0 0.0
      %280 = vmatpush1.msra.mxu0 0.0
      %281 = vmatprep.subr.mxu0 0.0
      %282 = vmatpush1.msra.mxu0 0.0
      %283 = vmatprep.subr.mxu0 0.0
      %284 = vmatpush1.msra.mxu0 0.0
      %285 = vmatprep.subr.mxu0 0.0
      %286 = vmatpush1.msra.mxu0 0.0
      %287 = vmatprep.subr.mxu0 0.0
      %288 = vmatpush1.msra.mxu0 0.0
      %289 = vmatprep.subr.mxu0 0.0
      %290 = vmatpush1.msra.mxu0 0.0
      %291 = vmatprep.mubr.f32.mxu0 0.0
      %292 = vmatmul.mubr.f32.gmra.mrb[0].mxu0 %v218
      %v293 = vpop.f32.mrb[0].mxu0
      %v294 = vadd.f32 0.0, %v293
      %v295 = vpop.f32.mrb[0].mxu0
      %v296 = vadd.f32 0.0, %v295
      %297 = vdwg.mxu0
      %298 = vmatprep.subr.mxu0 0.0
      %299 = vmatpush1.msra.mxu0 %v202
      %300 = vmatprep.subr.mxu0 0.0
      %301 = vmatpush1.msra.mxu0 %v225
      %302 = vmatprep.subr.mxu0 0.0
      %303 = vmatpush1.msra.mxu0 0.0
      %304 = vmatprep.subr.mxu0 0.0
      %305 = vmatpush1.msra.mxu0 0.0
      %306 = vmatprep.subr.mxu0 0.0
      %307 = vmatpush1.msra.mxu0 0.0
      %308 = vmatprep.subr.mxu0 0.0
      %309 = vmatpush1.msra.mxu0 0.0
      %310 = vmatprep.subr.mxu0 0.0
      %311 = vmatpush1.msra.mxu0 0.0
      %312 = vmatprep.subr.mxu0 0.0
      %313 = vmatpush1.msra.mxu0 0.0
      %314 = vmatprep.subr.mxu0 0.0
      %315 = vmatpush1.msra.mxu0 0.0
      %316 = vmatprep.subr.mxu0 0.0
      %317 = vmatpush1.msra.mxu0 0.0
      %318 = vmatprep.subr.mxu0 0.0
      %319 = vmatpush1.msra.mxu0 0.0
      %320 = vmatprep.subr.mxu0 0.0
      %321 = vmatpush1.msra.mxu0 0.0
      %322 = vmatprep.subr.mxu0 0.0
      %323 = vmatpush1.msra.mxu0 0.0
      %324 = vmatprep.subr.mxu0 0.0
      %325 = vmatpush1.msra.mxu0 0.0
      %326 = vmatprep.subr.mxu0 0.0
      %327 = vmatpush1.msra.mxu0 0.0
      %328 = vmatprep.subr.mxu0 0.0
      %329 = vmatpush1.msra.mxu0 0.0
      %330 = vmatprep.subr.mxu0 0.0
      %331 = vmatpush1.msra.mxu0 0.0
      %332 = vmatprep.subr.mxu0 0.0
      %333 = vmatpush1.msra.mxu0 0.0
      %334 = vmatprep.subr.mxu0 0.0
      %335 = vmatpush1.msra.mxu0 0.0
      %336 = vmatprep.subr.mxu0 0.0
      %337 = vmatpush1.msra.mxu0 0.0
      %338 = vmatprep.subr.mxu0 0.0
      %339 = vmatpush1.msra.mxu0 0.0
      %340 = vmatprep.subr.mxu0 0.0
      %341 = vmatpush1.msra.mxu0 0.0
      %342 = vmatprep.subr.mxu0 0.0
      %343 = vmatpush1.msra.mxu0 0.0
      %344 = vmatprep.subr.mxu0 0.0
      %345 = vmatpush1.msra.mxu0 0.0
      %346 = vmatprep.subr.mxu0 0.0
      %347 = vmatpush1.msra.mxu0 0.0
      %348 = vmatprep.subr.mxu0 0.0
      %349 = vmatpush1.msra.mxu0 0.0
      %350 = vmatprep.subr.mxu0 0.0
      %351 = vmatpush1.msra.mxu0 0.0
      %352 = vmatprep.subr.mxu0 0.0
      %353 = vmatpush1.msra.mxu0 0.0
      %354 = vmatprep.subr.mxu0 0.0
      %355 = vmatpush1.msra.mxu0 0.0
      %356 = vmatprep.subr.mxu0 0.0
      %357 = vmatpush1.msra.mxu0 0.0
      %358 = vmatprep.subr.mxu0 0.0
      %359 = vmatpush1.msra.mxu0 0.0
      %360 = vmatprep.subr.mxu0 0.0
      %361 = vmatpush1.msra.mxu0 0.0
      %362 = vmatprep.mubr.f32.mxu0 0.0
      %363 = vmatmul.mubr.f32.gmra.mrb[0].mxu0 %v218
      %v364 = vpop.f32.mrb[0].mxu0
      %v365 = vadd.f32 0.0, %v364
      %v366 = vpop.f32.mrb[0].mxu0
      %367 = vdwg.mxu0
      %v368 = vsel %vm217, %v187, 0
      %v370 = vsel %vm220, %v184, 0
      %v372 = vsel %vm220, %v185, 0
      %v374 = vsel %vm220, %v186, 0
      %376 = vmatprep.subr.mxu0 %v182
      %377 = vmatpush1.msra.mxu0 %v181
      %378 = vmatprep.subr.mxu0 %v372
      %379 = vmatpush1.msra.mxu0 %v370
      %380 = vmatprep.subr.mxu0 0.0
      %381 = vmatpush1.msra.mxu0 0.0
      %382 = vmatprep.subr.mxu0 0.0
      %383 = vmatpush1.msra.mxu0 0.0
      %384 = vmatprep.subr.mxu0 0.0
      %385 = vmatpush1.msra.mxu0 0.0
      %386 = vmatprep.subr.mxu0 0.0
      %387 = vmatpush1.msra.mxu0 0.0
      %388 = vmatprep.subr.mxu0 0.0
      %389 = vmatpush1.msra.mxu0 0.0
      %390 = vmatprep.subr.mxu0 0.0
      %391 = vmatpush1.msra.mxu0 0.0
      %392 = vmatprep.subr.mxu0 0.0
      %393 = vmatpush1.msra.mxu0 0.0
      %394 = vmatprep.subr.mxu0 0.0
      %395 = vmatpush1.msra.mxu0 0.0
      %396 = vmatprep.subr.mxu0 0.0
      %397 = vmatpush1.msra.mxu0 0.0
      %398 = vmatprep.subr.mxu0 0.0
      %399 = vmatpush1.msra.mxu0 0.0
      %400 = vmatprep.subr.mxu0 0.0
      %401 = vmatpush1.msra.mxu0 0.0
      %402 = vmatprep.subr.mxu0 0.0
      %403 = vmatpush1.msra.mxu0 0.0
      %404 = vmatprep.subr.mxu0 0.0
      %405 = vmatpush1.msra.mxu0 0.0
      %406 = vmatprep.subr.mxu0 0.0
      %407 = vmatpush1.msra.mxu0 0.0
      %408 = vmatprep.subr.mxu0 0.0
      %409 = vmatpush1.msra.mxu0 0.0
      %410 = vmatprep.subr.mxu0 0.0
      %411 = vmatpush1.msra.mxu0 0.0
      %412 = vmatprep.subr.mxu0 0.0
      %413 = vmatpush1.msra.mxu0 0.0
      %414 = vmatprep.subr.mxu0 0.0
      %415 = vmatpush1.msra.mxu0 0.0
      %416 = vmatprep.subr.mxu0 0.0
      %417 = vmatpush1.msra.mxu0 0.0
      %418 = vmatprep.subr.mxu0 0.0
      %419 = vmatpush1.msra.mxu0 0.0
      %420 = vmatprep.subr.mxu0 0.0
      %421 = vmatpush1.msra.mxu0 0.0
      %422 = vmatprep.subr.mxu0 0.0
      %423 = vmatpush1.msra.mxu0 0.0
      %424 = vmatprep.subr.mxu0 0.0
      %425 = vmatpush1.msra.mxu0 0.0
      %426 = vmatprep.subr.mxu0 0.0
      %427 = vmatpush1.msra.mxu0 0.0
      %428 = vmatprep.subr.mxu0 0.0
      %429 = vmatpush1.msra.mxu0 0.0
      %430 = vmatprep.subr.mxu0 0.0
      %431 = vmatpush1.msra.mxu0 0.0
      %432 = vmatprep.subr.mxu0 0.0
      %433 = vmatpush1.msra.mxu0 0.0
      %434 = vmatprep.subr.mxu0 0.0
      %435 = vmatpush1.msra.mxu0 0.0
      %436 = vmatprep.subr.mxu0 0.0
      %437 = vmatpush1.msra.mxu0 0.0
      %438 = vmatprep.subr.mxu0 0.0
      %439 = vmatpush1.msra.mxu0 0.0
      %440 = vmatprep.mubr.f32.mxu0 0.0
      %441 = vmatmul.mubr.f32.gmra.mrb[0].mxu0 %v368
      %v442 = vpop.f32.mrb[0].mxu0
      %v443 = vadd.f32 %v294, %v442
      %v444 = vpop.f32.mrb[0].mxu0
      %v445 = vadd.f32 %v296, %v444
      %446 = vdwg.mxu0
      %447 = vmatprep.subr.mxu0 0.0
      %448 = vmatpush1.msra.mxu0 %v183
      %449 = vmatprep.subr.mxu0 0.0
      %450 = vmatpush1.msra.mxu0 %v374
      %451 = vmatprep.subr.mxu0 0.0
      %452 = vmatpush1.msra.mxu0 0.0
      %453 = vmatprep.subr.mxu0 0.0
      %454 = vmatpush1.msra.mxu0 0.0
      %455 = vmatprep.subr.mxu0 0.0
      %456 = vmatpush1.msra.mxu0 0.0
      %457 = vmatprep.subr.mxu0 0.0
      %458 = vmatpush1.msra.mxu0 0.0
      %459 = vmatprep.subr.mxu0 0.0
      %460 = vmatpush1.msra.mxu0 0.0
      %461 = vmatprep.subr.mxu0 0.0
      %462 = vmatpush1.msra.mxu0 0.0
      %463 = vmatprep.subr.mxu0 0.0
      %464 = vmatpush1.msra.mxu0 0.0
      %465 = vmatprep.subr.mxu0 0.0
      %466 = vmatpush1.msra.mxu0 0.0
      %467 = vmatprep.subr.mxu0 0.0
      %468 = vmatpush1.msra.mxu0 0.0
      %469 = vmatprep.subr.mxu0 0.0
      %470 = vmatpush1.msra.mxu0 0.0
      %471 = vmatprep.subr.mxu0 0.0
      %472 = vmatpush1.msra.mxu0 0.0
      %473 = vmatprep.subr.mxu0 0.0
      %474 = vmatpush1.msra.mxu0 0.0
      %475 = vmatprep.subr.mxu0 0.0
      %476 = vmatpush1.msra.mxu0 0.0
      %477 = vmatprep.subr.mxu0 0.0
      %478 = vmatpush1.msra.mxu0 0.0
      %479 = vmatprep.subr.mxu0 0.0
      %480 = vmatpush1.msra.mxu0 0.0
      %481 = vmatprep.subr.mxu0 0.0
      %482 = vmatpush1.msra.mxu0 0.0
      %483 = vmatprep.subr.mxu0 0.0
      %484 = vmatpush1.msra.mxu0 0.0
      %485 = vmatprep.subr.mxu0 0.0
      %486 = vmatpush1.msra.mxu0 0.0
      %487 = vmatprep.subr.mxu0 0.0
      %488 = vmatpush1.msra.mxu0 0.0
      %489 = vmatprep.subr.mxu0 0.0
      %490 = vmatpush1.msra.mxu0 0.0
      %491 = vmatprep.subr.mxu0 0.0
      %492 = vmatpush1.msra.mxu0 0.0
      %493 = vmatprep.subr.mxu0 0.0
      %494 = vmatpush1.msra.mxu0 0.0
      %495 = vmatprep.subr.mxu0 0.0
      %496 = vmatpush1.msra.mxu0 0.0
      %497 = vmatprep.subr.mxu0 0.0
      %498 = vmatpush1.msra.mxu0 0.0
      %499 = vmatprep.subr.mxu0 0.0
      %500 = vmatpush1.msra.mxu0 0.0
      %501 = vmatprep.subr.mxu0 0.0
      %502 = vmatpush1.msra.mxu0 0.0
      %503 = vmatprep.subr.mxu0 0.0
      %504 = vmatpush1.msra.mxu0 0.0
      %505 = vmatprep.subr.mxu0 0.0
      %506 = vmatpush1.msra.mxu0 0.0
      %507 = vmatprep.subr.mxu0 0.0
      %508 = vmatpush1.msra.mxu0 0.0
      %509 = vmatprep.subr.mxu0 0.0
      %510 = vmatpush1.msra.mxu0 0.0
      %511 = vmatprep.mubr.f32.mxu0 0.0
      %512 = vmatmul.mubr.f32.gmra.mrb[0].mxu0 %v368
      %v513 = vpop.f32.mrb[0].mxu0
      %v514 = vadd.f32 %v365, %v513
      %v515 = vpop.f32.mrb[0].mxu0
      %516 = vdwg.mxu0
      %517 = vrot.lane.b32.xlu0 %v187, 104
      %v518 = vpop.permute.xlu0 %517
      %519 = vrot.lane.b32.xlu0 %v181, 92
      %v520 = vpop.permute.xlu0 %519
      %521 = vrot.lane.b32.xlu0 %v182, 92
      %v522 = vpop.permute.xlu0 %521
      %523 = vrot.lane.b32.xlu0 %v183, 92
      %v524 = vpop.permute.xlu0 %523
      %525 = vrot.lane.b32.xlu0 %v184, 92
      %v526 = vpop.permute.xlu0 %525
      %527 = vrot.lane.b32.xlu0 %v185, 92
      %v528 = vpop.permute.xlu0 %527
      %529 = vrot.lane.b32.xlu0 %v186, 92
      %v530 = vpop.permute.xlu0 %529
      %vm531 = vcmask 752640
      %v532 = vsel %vm531, %v520, %v522
      %v533 = vsel %vm531, %v522, %v524
      %v534 = vsel %vm531, %v526, %v528
      %v535 = vsel %vm531, %v528, %v530
      %v539 = vsel %vm217, %v518, 0
      %v541 = vsel %vm220, %v534, 0
      %v543 = vsel %vm220, %v535, 0
      %v545 = vsel %vm220, %v530, 0
      %547 = vmatprep.subr.mxu0 %v533
      %548 = vmatpush1.msra.mxu0 %v532
      %549 = vmatprep.subr.mxu0 %v543
      %550 = vmatpush1.msra.mxu0 %v541
      %551 = vmatprep.subr.mxu0 0.0
      %552 = vmatpush1.msra.mxu0 0.0
      %553 = vmatprep.subr.mxu0 0.0
      %554 = vmatpush1.msra.mxu0 0.0
      %555 = vmatprep.subr.mxu0 0.0
      %556 = vmatpush1.msra.mxu0 0.0
      %557 = vmatprep.subr.mxu0 0.0
      %558 = vmatpush1.msra.mxu0 0.0
      %559 = vmatprep.subr.mxu0 0.0
      %560 = vmatpush1.msra.mxu0 0.0
      %561 = vmatprep.subr.mxu0 0.0
      %562 = vmatpush1.msra.mxu0 0.0
      %563 = vmatprep.subr.mxu0 0.0
      %564 = vmatpush1.msra.mxu0 0.0
      %565 = vmatprep.subr.mxu0 0.0
      %566 = vmatpush1.msra.mxu0 0.0
      %567 = vmatprep.subr.mxu0 0.0
      %568 = vmatpush1.msra.mxu0 0.0
      %569 = vmatprep.subr.mxu0 0.0
      %570 = vmatpush1.msra.mxu0 0.0
      %571 = vmatprep.subr.mxu0 0.0
      %572 = vmatpush1.msra.mxu0 0.0
      %573 = vmatprep.subr.mxu0 0.0
      %574 = vmatpush1.msra.mxu0 0.0
      %575 = vmatprep.subr.mxu0 0.0
      %576 = vmatpush1.msra.mxu0 0.0
      %577 = vmatprep.subr.mxu0 0.0
      %578 = vmatpush1.msra.mxu0 0.0
      %579 = vmatprep.subr.mxu0 0.0
      %580 = vmatpush1.msra.mxu0 0.0
      %581 = vmatprep.subr.mxu0 0.0
      %582 = vmatpush1.msra.mxu0 0.0
      %583 = vmatprep.subr.mxu0 0.0
      %584 = vmatpush1.msra.mxu0 0.0
      %585 = vmatprep.subr.mxu0 0.0
      %586 = vmatpush1.msra.mxu0 0.0
      %587 = vmatprep.subr.mxu0 0.0
      %588 = vmatpush1.msra.mxu0 0.0
      %589 = vmatprep.subr.mxu0 0.0
      %590 = vmatpush1.msra.mxu0 0.0
      %591 = vmatprep.subr.mxu0 0.0
      %592 = vmatpush1.msra.mxu0 0.0
      %593 = vmatprep.subr.mxu0 0.0
      %594 = vmatpush1.msra.mxu0 0.0
      %595 = vmatprep.subr.mxu0 0.0
      %596 = vmatpush1.msra.mxu0 0.0
      %597 = vmatprep.subr.mxu0 0.0
      %598 = vmatpush1.msra.mxu0 0.0
      %599 = vmatprep.subr.mxu0 0.0
      %600 = vmatpush1.msra.mxu0 0.0
      %601 = vmatprep.subr.mxu0 0.0
      %602 = vmatpush1.msra.mxu0 0.0
      %603 = vmatprep.subr.mxu0 0.0
      %604 = vmatpush1.msra.mxu0 0.0
      %605 = vmatprep.subr.mxu0 0.0
      %606 = vmatpush1.msra.mxu0 0.0
      %607 = vmatprep.subr.mxu0 0.0
      %608 = vmatpush1.msra.mxu0 0.0
      %609 = vmatprep.subr.mxu0 0.0
      %610 = vmatpush1.msra.mxu0 0.0
      %611 = vmatprep.mubr.f32.mxu0 0.0
      %612 = vmatmul.mubr.f32.gmra.mrb[0].mxu0 %v539
      %v613 = vpop.f32.mrb[0].mxu0
      %v614 = vadd.f32 0.0, %v613
      %v615 = vpop.f32.mrb[0].mxu0
      %v616 = vadd.f32 0.0, %v615
      %617 = vdwg.mxu0
      %618 = vmatprep.subr.mxu0 0.0
      %619 = vmatpush1.msra.mxu0 %v524
      %620 = vmatprep.subr.mxu0 0.0
      %621 = vmatpush1.msra.mxu0 %v545
      %622 = vmatprep.subr.mxu0 0.0
      %623 = vmatpush1.msra.mxu0 0.0
      %624 = vmatprep.subr.mxu0 0.0
      %625 = vmatpush1.msra.mxu0 0.0
      %626 = vmatprep.subr.mxu0 0.0
      %627 = vmatpush1.msra.mxu0 0.0
      %628 = vmatprep.subr.mxu0 0.0
      %629 = vmatpush1.msra.mxu0 0.0
      %630 = vmatprep.subr.mxu0 0.0
      %631 = vmatpush1.msra.mxu0 0.0
      %632 = vmatprep.subr.mxu0 0.0
      %633 = vmatpush1.msra.mxu0 0.0
      %634 = vmatprep.subr.mxu0 0.0
      %635 = vmatpush1.msra.mxu0 0.0
      %636 = vmatprep.subr.mxu0 0.0
      %637 = vmatpush1.msra.mxu0 0.0
      %638 = vmatprep.subr.mxu0 0.0
      %639 = vmatpush1.msra.mxu0 0.0
      %640 = vmatprep.subr.mxu0 0.0
      %641 = vmatpush1.msra.mxu0 0.0
      %642 = vmatprep.subr.mxu0 0.0
      %643 = vmatpush1.msra.mxu0 0.0
      %644 = vmatprep.subr.mxu0 0.0
      %645 = vmatpush1.msra.mxu0 0.0
      %646 = vmatprep.subr.mxu0 0.0
      %647 = vmatpush1.msra.mxu0 0.0
      %648 = vmatprep.subr.mxu0 0.0
      %649 = vmatpush1.msra.mxu0 0.0
      %650 = vmatprep.subr.mxu0 0.0
      %651 = vmatpush1.msra.mxu0 0.0
      %652 = vmatprep.subr.mxu0 0.0
      %653 = vmatpush1.msra.mxu0 0.0
      %654 = vmatprep.subr.mxu0 0.0
      %655 = vmatpush1.msra.mxu0 0.0
      %656 = vmatprep.subr.mxu0 0.0
      %657 = vmatpush1.msra.mxu0 0.0
      %658 = vmatprep.subr.mxu0 0.0
      %659 = vmatpush1.msra.mxu0 0.0
      %660 = vmatprep.subr.mxu0 0.0
      %661 = vmatpush1.msra.mxu0 0.0
      %662 = vmatprep.subr.mxu0 0.0
      %663 = vmatpush1.msra.mxu0 0.0
      %664 = vmatprep.subr.mxu0 0.0
      %665 = vmatpush1.msra.mxu0 0.0
      %666 = vmatprep.subr.mxu0 0.0
      %667 = vmatpush1.msra.mxu0 0.0
      %668 = vmatprep.subr.mxu0 0.0
      %669 = vmatpush1.msra.mxu0 0.0
      %670 = vmatprep.subr.mxu0 0.0
      %671 = vmatpush1.msra.mxu0 0.0
      %672 = vmatprep.subr.mxu0 0.0
      %673 = vmatpush1.msra.mxu0 0.0
      %674 = vmatprep.subr.mxu0 0.0
      %675 = vmatpush1.msra.mxu0 0.0
      %676 = vmatprep.subr.mxu0 0.0
      %677 = vmatpush1.msra.mxu0 0.0
      %678 = vmatprep.subr.mxu0 0.0
      %679 = vmatpush1.msra.mxu0 0.0
      %680 = vmatprep.subr.mxu0 0.0
      %681 = vmatpush1.msra.mxu0 0.0
      %682 = vmatprep.mubr.f32.mxu0 0.0
      %683 = vmatmul.mubr.f32.gmra.mrb[0].mxu0 %v539
      %v684 = vpop.f32.mrb[0].mxu0
      %v685 = vadd.f32 0.0, %v684
      %v686 = vpop.f32.mrb[0].mxu0
      %687 = vdwg.mxu0
      %v688 = vadd.f32 %v443, %v614
      %v689 = vadd.f32 %v445, %v616
      %v690 = vadd.f32 %v514, %v685
      %v691 = vadd.f32 %v688, %v689
      %vm692 = vcmask 556032
      %v693 = vsel %vm692, %v690, 0.0
      %v694 = vadd.f32 %v691, %v693
      %695 = vadd.xlane.f32.xlu0 %v694
      %v696 = vpop.xlane.xlu0 %695
      %v697 = vmul.f32 %v688, %v688
      %v698 = vmul.f32 %v689, %v689
      %v699 = vmul.f32 %v690, %v690
      %v700 = vadd.f32 %v697, %v698
      %v701 = vsel %vm692, %v699, 0.0
      %v702 = vadd.f32 %v700, %v701
      %703 = vadd.xlane.f32.xlu0 %v702
      %v704 = vpop.xlane.xlu0 %703
      %v705 = vmul.f32 %v696, 0.0030864198
      %v706 = vmul.f32 %v704, 0.0030864198
      %v707 = vmul.f32 %v705, %v705
      %v708 = vsub.f32 %v706, %v707
      %v709 = vmax.f32 %v708, 0.0
      %v710 = vsub.f32 %v688, %v705
      %v711 = vsub.f32 %v689, %v705
      %v712 = vsub.f32 %v690, %v705
      %v713 = vadd.f32 %v709, 1e-05
      %v714 = vrsqrt.pop %v713
      %v715 = vmul.f32 %v710, %v714
      %v716 = vmul.f32 %v711, %v714
      %v717 = vmul.f32 %v712, %v714
      %v718 = vmax.f32 %v715, 0.0
      %v719 = vmax.f32 %v716, 0.0
      %v720 = vmax.f32 %v717, 0.0
      %721 = vst [vmem:[%s179] sm:$0xff] %v718
      %722 = vst [vmem:[%s179 + $0x8] sm:$0xff] %v719
      %723 = vst.msk [vmem:[%s179 + $0x10] sm:$0xff] %vm692, %v720
      %s724 = smul.u32 3, %s18
      %p725 = scmp.lt.s32.totalorder %s17, 1
      %s726 = scalar_select %p725, %s17, 1
      %p727 = scmp.lt.s32.totalorder %s724, 2
      %s728 = scalar_select %p727, %s724, 2
      %s729 = smul.addr %s726, 3
      %s730 = sadd.s32 %s728, %s729
      %s731 = smul.addr %s730, 8
      %s732 = scalar_lea.vmem %s2, %s731
      // Predicated region
      $region29: #{deconv2d.1} parent=27 // pred_check
        %p733 = pneg %p94
      $region30: #{deconv2d.1} parent=27 // pred_check_branch
        %735 = sbr.rel (%p733) target = $region32
      $region31: #{deconv2d.1} parent=27 // pred_region
        %s736 = smul.u32 3, %s18
      $region32: #{deconv2d.1} parent=27 // pred_fallthru
        _
    $region28: #{deconv2d.1} parent=5 // pred_fallthru
      _
    %p737 = scmp.le.s32.totalorder 2, %s8
    // Predicated region
    $region33: #{deconv2d.1} parent=5 // pred_check
      %p738 = pneg %p737
    $region34: #{deconv2d.1} parent=5 // pred_check_branch
      %740 = sbr.rel (%p738) target = $region36
    $region35: #{deconv2d.1} parent=5 // pred_region
      %s741 = ssub.s32 %s8, 2
      // Predicated region
      $region37: #{deconv2d.1} parent=35 // pred_check
        %p742 = pneg %p100
      $region38: #{deconv2d.1} parent=35 // pred_check_branch
        %744 = sbr.rel (%p742) target = $region40
      $region39: #{deconv2d.1} parent=35 // pred_region
        %s745 = smul.u32 3, %s20
        %p746 = scmp.lt.s32.totalorder %s19, 1
        %s747 = scalar_select %p746, %s19, 1
        %p748 = scmp.lt.s32.totalorder %s745, 2
        %s749 = scalar_select %p748, %s745, 2
        %s750 = smul.addr %s747, 3
        %s751 = sadd.s32 %s749, %s750
        %s752 = smul.addr %s751, 8
        %s753 = scalar_lea.vmem %s2, %s752
      $region40: #{deconv2d.1} parent=35 // pred_fallthru
        _
    $region36: #{deconv2d.1} parent=5 // pred_fallthru
      _
  $region6: #{deconv2d.1} parent=0 // loop_footer
    %s12 = sadd.s32 1, %s8
  $region7: #{deconv2d.1} parent=0 // loop_footer_branch
    %7 = sbr.rel target = $region3
  $region8: #{deconv2d.1} parent=0 // loop_exit
    _

</llo_original>
